<compile_context>
chip_gen: v6e
topology: v6e:2x2x1
jax: 0.10.0
libtpu: 0.0.40
codegen_flags: <defaults>
</compile_context>

<pallas_src>
import functools

import jax
import jax.numpy as jnp
from jax.experimental import pallas as pl
from jax.experimental.pallas import tpu as pltpu


def _pair(v):
    return tuple(v) if isinstance(v, (tuple, list)) else (v, v)


def _quadruple(v):
    return tuple(v) if isinstance(v, (tuple, list)) else (v, v, v, v)


# ---------------------------------------------------------------------------
# Median selection network (elementwise min/max only -> VPU)
# ---------------------------------------------------------------------------
def _minmax_to_ends(work):
    """In-place compare-exchange network over the python list `work`.

    Afterwards work[0] holds the elementwise minimum and work[-1] the
    elementwise maximum of the input multiset; all other slots still hold
    members of the multiset (every op is a min/max compare-exchange).
    Cost ~ 3*len(work)/2 compare-exchanges.
    """
    s = len(work)

    def cx(i, j):
        a, b = work[i], work[j]
        work[i] = jnp.minimum(a, b)
        work[j] = jnp.maximum(a, b)

    # 1) pair neighbours: even slot <= odd slot
    for i in range(0, s - 1, 2):
        cx(i, i + 1)
    lows = list(range(0, s, 2))
    highs = list(range(1, s, 2))
    if s % 2 == 1:                 # unpaired last slot joins both chains
        highs.append(s - 1)
    # 2) min-chain into slot 0
    for e in lows[1:]:
        cx(0, e)
    # 3) max-chain into the last slot
    for a, b in zip(highs[:-1], highs[1:]):
        cx(a, b)


def _forgetful_lower_median(producers):
    """Elementwise LOWER median (rank (n-1)//2, matching torch.median) of n
    arrays, produced lazily by zero-arg callables in `producers`.

    Forgetful selection: the working set only holds elements that can still be
    the median; its min and max are discarded as soon as that is provably safe.
    For n == 9 this reproduces the classic 20-compare-exchange median-of-9.
    """
    n = len(producers)
    if n == 1:
        return producers[0]()
    rank = (n - 1) // 2
    work = []
    next_idx = 0

    def produce(cnt):
        nonlocal next_idx
        for _ in range(cnt):
            work.append(producers[next_idx]())
            next_idx += 1

    while True:
        alive = len(work) + (n - next_idx)
        if next_idx < n:
            # smallest working set that lets us drop both its min and its max
            need = min(max(alive - rank + 1, rank + 2), alive)
            if need > len(work):
                produce(need - len(work))
        wlen = len(work)
        alive = wlen + (n - next_idx)
        if wlen == alive:                      # everything materialized
            if wlen == 1:
                return work[0]
            if rank == 0:
                return functools.reduce(jnp.minimum, work)
            if rank == wlen - 1:
                return functools.reduce(jnp.maximum, work)
            _minmax_to_ends(work)
            work.pop()                         # drop max: rank unchanged
            work.pop(0)                        # drop min: one below target gone
            rank -= 1
            continue
        # unproduced candidates remain; drop both extremes if provably safe:
        #   min of wlen of alive elems has rank <= alive - wlen (< rank)
        #   max of wlen of alive elems has rank >= wlen - 1     (> rank)
        if wlen > alive - rank and wlen > rank + 1:
            _minmax_to_ends(work)
            work.pop()
            work.pop(0)
            rank -= 1
        # else: loop back and produce more


# ---------------------------------------------------------------------------
# Pallas kernel
# ---------------------------------------------------------------------------
def _make_median_kernel(k0, k1, Ho, Wo):
    def kernel(x_ref, o_ref):
        # x_ref: (BC, Hp, Wp)  -- H on sublanes, W on lanes
        # o_ref: (BC, Ho, Wo)
        producers = []
        for di in range(k0):
            for dj in range(k1):
                def prod(di=di, dj=dj):
                    # static slices along sublane (H) / lane (W) axes only;
                    # leading channel axis stays full
                    return x_ref[:, pl.ds(di, Ho), pl.ds(dj, Wo)]
                producers.append(prod)
        med = _forgetful_lower_median(producers)
        o_ref[...] = med.astype(o_ref.dtype)

    return kernel


def _pick_channels_per_block(NC, per_channel_bytes, budget):
    """Largest divisor of NC whose per-step footprint fits `budget`."""
    best = 1
    for d in range(1, NC + 1):
        if NC % d == 0 and d * per_channel_bytes <= budget:
            best = d
    return best


def median_pool2d(x, kernel_size=3, stride=1, padding=0, same=False):
    """Pallas TPU implementation of MedianPool2d.forward.  x: (N, C, H, W)."""
    k = _pair(kernel_size)
    s = _pair(stride)
    pad = _quadruple(padding)
    N, C, H, W = x.shape

    # ---- padding computation (mirrors MedianPool2d._padding) ----
    if same:
        ph = max(k[0] - s[0], 0) if H % s[0] == 0 else max(k[0] - H % s[0], 0)
        pw = max(k[1] - s[1], 0) if W % s[1] == 0 else max(k[1] - W % s[1], 0)
        p_left = pw // 2
        pad = (p_left, pw - p_left, ph // 2, ph - ph // 2)

    # reflect padding requires pad < spatial dim (same as torch F.pad)
    assert pad[0] < W and pad[1] < W and pad[2] < H and pad[3] < H, \
        "reflect padding must be smaller than the spatial dims"

    # F.pad quadruple order is (left, right, top, bottom): W first, then H.
    x_p = jnp.pad(x, ((0, 0), (0, 0), (pad[2], pad[3]), (pad[0], pad[1])),
                  mode="reflect")
    Hp, Wp = x_p.shape[2], x_p.shape[3]

    # stride-1 window extents; strided results are a subsample (see below)
    Ho = Hp - k[0] + 1
    Wo = Wp - k[1] + 1
    assert Ho >= 1 and Wo >= 1, "kernel larger than padded input"

    NC = N * C
    x_flat = x_p.reshape(NC, Hp, Wp)          # no transpose, no lane padding

    itemsize = x.dtype.itemsize
    in_c = Hp * Wp * itemsize
    out_c = Ho * Wo * itemsize
    live = k[0] * k[1] // 2 + 2               # forgetful-network working set
    per_c = 2 * in_c + (2 + live) * out_c     # dbl-buffered in/out + live vals

    budget = 12 * 1024 * 1024                 # under every chip's default VMEM
    BC = _pick_channels_per_block(NC, per_c, budget)
    footprint = BC * per_c
    vmem_limit = None
    if footprint > budget:
        # a single channel is already huge (very large spatial dims)
        # TODO(synk): tile spatially into row strips with a (k0-1)-row halo
        # (manual DMA double-buffering) instead of whole-image blocks.
        vmem_limit = int(min(footprint * 3 // 2, 100 * 1024 * 1024))

    kernel = _make_median_kernel(k[0], k[1], Ho, Wo)

    out_flat = pl.pallas_call(
        kernel,
        out_shape=jax.ShapeDtypeStruct((NC, Ho, Wo), x.dtype),
        grid=(NC // BC,),
        in_specs=[pl.BlockSpec((BC, Hp, Wp), lambda i: (i, 0, 0))],
        out_specs=pl.BlockSpec((BC, Ho, Wo), lambda i: (i, 0, 0)),
        compiler_params=pltpu.CompilerParams(
            dimension_semantics=("parallel",),
            vmem_limit_bytes=vmem_limit,
        ),
        cost_estimate=pl.CostEstimate(
            flops=int(NC * Ho * Wo * 4 * k[0] * k[1]),
            transcendentals=0,
            bytes_accessed=int(NC * (Hp * Wp + Ho * Wo) * itemsize),
        ),
    )(x_flat)

    out = out_flat.reshape(N, C, Ho, Wo)
    if s != (1, 1):
        # TODO(synk): stride > 1 is applied by subsampling the stride-1 result;
        # in-kernel strided window starts would save ~s0*s1 x compute.
        out = out[:, :, ::s[0], ::s[1]]
    return out


# ---------------------------------------------------------------------------
# Pure-JAX reference (matches the torch module) for sanity checking
# ---------------------------------------------------------------------------
def _reference_median_pool2d(x, kernel_size=3, stride=1, padding=0, same=False):
    k = _pair(kernel_size)
    s = _pair(stride)
    pad = _quadruple(padding)
    N, C, H, W = x.shape
    if same:
        ph = max(k[0] - s[0], 0) if H % s[0] == 0 else max(k[0] - H % s[0], 0)
        pw = max(k[1] - s[1], 0) if W % s[1] == 0 else max(k[1] - W % s[1], 0)
        p_left = pw // 2
        pad = (p_left, pw - p_left, ph // 2, ph - ph // 2)
    x_p = jnp.pad(x, ((0, 0), (0, 0), (pad[2], pad[3]), (pad[0], pad[1])),
                  mode="reflect")
    _, _, Hp, Wp = x_p.shape
    Ho = (Hp - k[0]) // s[0] + 1
    Wo = (Wp - k[1]) // s[1] + 1
    wins = []
    for di in range(k[0]):
        for dj in range(k[1]):
            wins.append(x_p[:, :, di:di + (Ho - 1) * s[0] + 1:s[0],
                            dj:dj + (Wo - 1) * s[1] + 1:s[1]])
    stacked = jnp.stack(wins, axis=-1)
    return jnp.sort(stacked, axis=-1)[..., (k[0] * k[1] - 1) // 2]


if __name__ == "__main__":
    key = jax.random.PRNGKey(0)
    x = jax.random.normal(key, (2, 4, 16, 16), dtype=jnp.float32)

    # default config: 3x3, stride 1, no padding
    out = jax.block_until_ready(
        median_pool2d(x, kernel_size=3, stride=1, padding=0, same=False))
    ref = _reference_median_pool2d(x, 3, 1, 0, False)
    assert out.shape == (2, 4, 14, 14), out.shape
    assert jnp.allclose(out, ref, atol=1e-6), "mismatch (default config)"

    # 'same' padding
    out2 = jax.block_until_ready(median_pool2d(x, 3, 1, 0, same=True))
    ref2 = _reference_median_pool2d(x, 3, 1, 0, True)
    assert out2.shape == (2, 4, 16, 16), out2.shape
    assert jnp.allclose(out2, ref2, atol=1e-6), "mismatch (same=True)"

    # strided pooling (stride-1 kernel result is subsampled)
    out3 = jax.block_until_ready(median_pool2d(x, 3, 2, 1, same=False))
    ref3 = _reference_median_pool2d(x, 3, 2, 1, False)
    assert out3.shape == ref3.shape, (out3.shape, ref3.shape)
    assert jnp.allclose(out3, ref3, atol=1e-6), "mismatch (stride=2)"

    print("KERNEL_OK")
</pallas_src>

<mosaic_0001>
module attributes {stable_mosaic.version = 11 : i64} {
  func.func @kernel(%arg0: i32, %arg1: memref<8x16x16xf32, #tpu.memory_space<vmem>>, %arg2: memref<8x14x14xf32, #tpu.memory_space<vmem>>) attributes {dimension_semantics = [#tpu.dimension_semantics<parallel>], iteration_bounds = array<i64: 1>, scalar_prefetch = 0 : i64, scratch_operands = 0 : i64, tpu.core_type = #tpu.core_type<tc>, window_params = [{transform_indices = @transform_0, window_bounds = array<i64: 8, 16, 16>}, {transform_indices = @transform_1, window_bounds = array<i64: 8, 14, 14>}]} {
    %c0 = arith.constant 0 : index
    %c0_0 = arith.constant 0 : index
    %c0_1 = arith.constant 0 : index
    %0 = vector.load %arg1[%c0, %c0_0, %c0_1] : memref<8x16x16xf32, #tpu.memory_space<vmem>>, vector<8x14x14xf32>
    %c0_2 = arith.constant 0 : index
    %c0_3 = arith.constant 0 : index
    %c1 = arith.constant 1 : index
    %1 = vector.load %arg1[%c0_2, %c0_3, %c1] : memref<8x16x16xf32, #tpu.memory_space<vmem>>, vector<8x14x14xf32>
    %c0_4 = arith.constant 0 : index
    %c0_5 = arith.constant 0 : index
    %c2 = arith.constant 2 : index
    %2 = vector.load %arg1[%c0_4, %c0_5, %c2] : memref<8x16x16xf32, #tpu.memory_space<vmem>>, vector<8x14x14xf32>
    %c0_6 = arith.constant 0 : index
    %c1_7 = arith.constant 1 : index
    %c0_8 = arith.constant 0 : index
    %3 = vector.load %arg1[%c0_6, %c1_7, %c0_8] : memref<8x16x16xf32, #tpu.memory_space<vmem>>, vector<8x14x14xf32>
    %c0_9 = arith.constant 0 : index
    %c1_10 = arith.constant 1 : index
    %c1_11 = arith.constant 1 : index
    %4 = vector.load %arg1[%c0_9, %c1_10, %c1_11] : memref<8x16x16xf32, #tpu.memory_space<vmem>>, vector<8x14x14xf32>
    %c0_12 = arith.constant 0 : index
    %c1_13 = arith.constant 1 : index
    %c2_14 = arith.constant 2 : index
    %5 = vector.load %arg1[%c0_12, %c1_13, %c2_14] : memref<8x16x16xf32, #tpu.memory_space<vmem>>, vector<8x14x14xf32>
    %6 = arith.minimumf %0, %1 : vector<8x14x14xf32>
    %7 = arith.maximumf %0, %1 : vector<8x14x14xf32>
    %8 = arith.minimumf %2, %3 : vector<8x14x14xf32>
    %9 = arith.maximumf %2, %3 : vector<8x14x14xf32>
    %10 = arith.minimumf %4, %5 : vector<8x14x14xf32>
    %11 = arith.maximumf %4, %5 : vector<8x14x14xf32>
    %12 = arith.minimumf %6, %8 : vector<8x14x14xf32>
    %13 = arith.maximumf %6, %8 : vector<8x14x14xf32>
    %14 = arith.maximumf %12, %10 : vector<8x14x14xf32>
    %15 = arith.minimumf %7, %9 : vector<8x14x14xf32>
    %16 = arith.maximumf %7, %9 : vector<8x14x14xf32>
    %17 = arith.minimumf %16, %11 : vector<8x14x14xf32>
    %c0_15 = arith.constant 0 : index
    %c2_16 = arith.constant 2 : index
    %c0_17 = arith.constant 0 : index
    %18 = vector.load %arg1[%c0_15, %c2_16, %c0_17] : memref<8x16x16xf32, #tpu.memory_space<vmem>>, vector<8x14x14xf32>
    %19 = arith.minimumf %15, %13 : vector<8x14x14xf32>
    %20 = arith.maximumf %15, %13 : vector<8x14x14xf32>
    %21 = arith.minimumf %17, %14 : vector<8x14x14xf32>
    %22 = arith.maximumf %17, %14 : vector<8x14x14xf32>
    %23 = arith.minimumf %19, %21 : vector<8x14x14xf32>
    %24 = arith.maximumf %19, %21 : vector<8x14x14xf32>
    %25 = arith.maximumf %23, %18 : vector<8x14x14xf32>
    %26 = arith.minimumf %20, %22 : vector<8x14x14xf32>
    %27 = arith.maximumf %20, %22 : vector<8x14x14xf32>
    %28 = arith.minimumf %27, %25 : vector<8x14x14xf32>
    %c0_18 = arith.constant 0 : index
    %c2_19 = arith.constant 2 : index
    %c1_20 = arith.constant 1 : index
    %29 = vector.load %arg1[%c0_18, %c2_19, %c1_20] : memref<8x16x16xf32, #tpu.memory_space<vmem>>, vector<8x14x14xf32>
    %30 = arith.minimumf %26, %24 : vector<8x14x14xf32>
    %31 = arith.maximumf %26, %24 : vector<8x14x14xf32>
    %32 = arith.minimumf %28, %29 : vector<8x14x14xf32>
    %33 = arith.maximumf %28, %29 : vector<8x14x14xf32>
    %34 = arith.maximumf %30, %32 : vector<8x14x14xf32>
    %35 = arith.minimumf %31, %33 : vector<8x14x14xf32>
    %c0_21 = arith.constant 0 : index
    %c2_22 = arith.constant 2 : index
    %c2_23 = arith.constant 2 : index
    %36 = vector.load %arg1[%c0_21, %c2_22, %c2_23] : memref<8x16x16xf32, #tpu.memory_space<vmem>>, vector<8x14x14xf32>
    %37 = arith.minimumf %35, %34 : vector<8x14x14xf32>
    %38 = arith.maximumf %35, %34 : vector<8x14x14xf32>
    %39 = arith.maximumf %37, %36 : vector<8x14x14xf32>
    %40 = arith.minimumf %38, %39 : vector<8x14x14xf32>
    %c0_24 = arith.constant 0 : index
    %c0_25 = arith.constant 0 : index
    %c0_26 = arith.constant 0 : index
    %41 = vector.load %arg2[%c0_24, %c0_25, %c0_26] : memref<8x14x14xf32, #tpu.memory_space<vmem>>, vector<8x14x14xf32>
    tpu.vector_store %arg2[%c0_24, %c0_25, %c0_26], %40 {strides = array<i32>} : memref<8x14x14xf32, #tpu.memory_space<vmem>>, vector<8x14x14xf32>,
    return
  }
  func.func @transform_0(%arg0: i32) -> (i32, i32, i32) {
    %c0_i32 = arith.constant 0 : i32
    %c0_i32_0 = arith.constant 0 : i32
    %c0_i32_1 = arith.constant 0 : i32
    return %arg0, %c0_i32, %c0_i32_0 : i32, i32, i32
  }
  func.func @transform_1(%arg0: i32) -> (i32, i32, i32) {
    %c0_i32 = arith.constant 0 : i32
    %c0_i32_0 = arith.constant 0 : i32
    %c0_i32_1 = arith.constant 0 : i32
    return %arg0, %c0_i32, %c0_i32_0 : i32, i32, i32
  }
}

</mosaic_0001>

<llo_original>
// kernel: tpu_custom_call.1
$region0: #{tpu_custom_call.1}
  #allocation0 [shape = 'u32[]', space=smem, size = 0x4, offset = 0x4, fixed_abs, tag = 'smem constant byte address 0x4 - core index']
  #allocation1 [shape = 'u32[144,128]{1,0:T(1,128)}', space=vmem, size = 0x12000, scoped, tag = 'internal scratch']
  %s0 = inlined_call_operand.hbm [shape: f32[8,16,16], index: 0, kind: input, shape index: {}]
  %s1 = inlined_call_operand.vmem [shape: f32[8,14,14], index: 1, kind: output, shape index: {}]
  %s2 = sld [smem:[#allocation0]]
  $region18: #{tpu_custom_call.1} parent=0
    _
  %s4 = ssub.s32 1, %s2
  %s5 = scalar_select 0, %s4, %s2
  $region1: #{tpu_custom_call.1} parent=0
    #allocation2 [shape = 'u8[65536]{0}', space=vmem, size = 0x10000, scoped, tag = 'input window, operand 0, single buffered']
    #allocation3 [shape = 's32[1]{0}', space=sflag, size = 0x4, scoped, tag = 'scoped memory for tpu_custom_call.1']
    %6 = vsyncpa [#allocation3], 0
    // Predicated region
    $region2: #{tpu_custom_call.1} parent=1 // pred_check
      _
    $region3: #{tpu_custom_call.1} parent=1 // pred_check_branch
      %8 = sbr.rel (0) target = $region5
    $region4: #{tpu_custom_call.1} parent=1 // pred_region
      %s10 = ssub.s32 2048, 2048
      %11 = vsyncadd [#allocation3], %s10
      %s12 = sshll.u32 [#allocation2], 4
      %s13 = int_to_ptr.vmem [resolvable:$true] %s12
      %18 = dma.hbm_to_vmem [thread:$0]  %s0, 2048, %s13, [#allocation3], 128, 128, 8
    $region5: #{tpu_custom_call.1} parent=1 // pred_fallthru
      _
    // Predicated region
    $region6: #{tpu_custom_call.1} parent=1 // pred_check
      _
    $region7: #{tpu_custom_call.1} parent=1 // pred_check_branch
      %20 = sbr.rel (0) target = $region9
    $region8: #{tpu_custom_call.1} parent=1 // pred_region
      %21 = dma.done [#allocation3], 2048
    $region9: #{tpu_custom_call.1} parent=1 // pred_fallthru
      _
    %v22 = vld [vmem:[#allocation2] sm:$0xff]
    %v23 = vld [vmem:[#allocation2 + $0x8] sm:$0x3f]
    %v24 = vld [vmem:[#allocation2 + $0x10] sm:$0xff]
    %v25 = vld [vmem:[#allocation2 + $0x18] sm:$0x3f]
    %v26 = vld [vmem:[#allocation2 + $0x20] sm:$0xff]
    %v27 = vld [vmem:[#allocation2 + $0x28] sm:$0x3f]
    %v28 = vld [vmem:[#allocation2 + $0x30] sm:$0xff]
    %v29 = vld [vmem:[#allocation2 + $0x38] sm:$0x3f]
    %v30 = vld [vmem:[#allocation2 + $0x40] sm:$0xff]
    %v31 = vld [vmem:[#allocation2 + $0x48] sm:$0x3f]
    %v32 = vld [vmem:[#allocation2 + $0x50] sm:$0xff]
    %v33 = vld [vmem:[#allocation2 + $0x58] sm:$0x3f]
    %v34 = vld [vmem:[#allocation2 + $0x60] sm:$0xff]
    %v35 = vld [vmem:[#allocation2 + $0x68] sm:$0x3f]
    %v36 = vld [vmem:[#allocation2 + $0x70] sm:$0xff]
    %v37 = vld [vmem:[#allocation2 + $0x78] sm:$0x3f]
    %v38 = vld [vmem:[#allocation2 + $0x1] sm:$0xff]
    %v39 = vld [vmem:[#allocation2 + $0x9] sm:$0x3f]
    %v40 = vld [vmem:[#allocation2 + $0x11] sm:$0xff]
    %v41 = vld [vmem:[#allocation2 + $0x19] sm:$0x3f]
    %v42 = vld [vmem:[#allocation2 + $0x21] sm:$0xff]
    %v43 = vld [vmem:[#allocation2 + $0x29] sm:$0x3f]
    %v44 = vld [vmem:[#allocation2 + $0x31] sm:$0xff]
    %v45 = vld [vmem:[#allocation2 + $0x39] sm:$0x3f]
    %v46 = vld [vmem:[#allocation2 + $0x41] sm:$0xff]
    %v47 = vld [vmem:[#allocation2 + $0x49] sm:$0x3f]
    %v48 = vld [vmem:[#allocation2 + $0x51] sm:$0xff]
    %v49 = vld [vmem:[#allocation2 + $0x59] sm:$0x3f]
    %v50 = vld [vmem:[#allocation2 + $0x61] sm:$0xff]
    %v51 = vld [vmem:[#allocation2 + $0x69] sm:$0x3f]
    %v52 = vld [vmem:[#allocation2 + $0x71] sm:$0xff]
    %v53 = vld [vmem:[#allocation2 + $0x79] sm:$0x3f]
    %70 = vrot.lane.b32.xlu0 %v22, 127
    %v71 = vpop.permute.xlu0 %70
    %72 = vrot.lane.b32.xlu0 %v23, 127
    %v73 = vpop.permute.xlu0 %72
    %74 = vrot.lane.b32.xlu0 %v24, 127
    %v75 = vpop.permute.xlu0 %74
    %76 = vrot.lane.b32.xlu0 %v25, 127
    %v77 = vpop.permute.xlu0 %76
    %78 = vrot.lane.b32.xlu0 %v26, 127
    %v79 = vpop.permute.xlu0 %78
    %80 = vrot.lane.b32.xlu0 %v27, 127
    %v81 = vpop.permute.xlu0 %80
    %82 = vrot.lane.b32.xlu0 %v28, 127
    %v83 = vpop.permute.xlu0 %82
    %84 = vrot.lane.b32.xlu0 %v29, 127
    %v85 = vpop.permute.xlu0 %84
    %86 = vrot.lane.b32.xlu0 %v30, 127
    %v87 = vpop.permute.xlu0 %86
    %88 = vrot.lane.b32.xlu0 %v31, 127
    %v89 = vpop.permute.xlu0 %88
    %90 = vrot.lane.b32.xlu0 %v32, 127
    %v91 = vpop.permute.xlu0 %90
    %92 = vrot.lane.b32.xlu0 %v33, 127
    %v93 = vpop.permute.xlu0 %92
    %94 = vrot.lane.b32.xlu0 %v34, 127
    %v95 = vpop.permute.xlu0 %94
    %96 = vrot.lane.b32.xlu0 %v35, 127
    %v97 = vpop.permute.xlu0 %96
    %98 = vrot.lane.b32.xlu0 %v36, 127
    %v99 = vpop.permute.xlu0 %98
    %100 = vrot.lane.b32.xlu0 %v37, 127
    %v101 = vpop.permute.xlu0 %100
    %v118 = vmin.f32 %v22, %v71
    %v119 = vmin.f32 %v23, %v73
    %v120 = vmin.f32 %v24, %v75
    %v121 = vmin.f32 %v25, %v77
    %v122 = vmin.f32 %v26, %v79
    %v123 = vmin.f32 %v27, %v81
    %v124 = vmin.f32 %v28, %v83
    %v125 = vmin.f32 %v29, %v85
    %v126 = vmin.f32 %v30, %v87
    %v127 = vmin.f32 %v31, %v89
    %v128 = vmin.f32 %v32, %v91
    %v129 = vmin.f32 %v33, %v93
    %v130 = vmin.f32 %v34, %v95
    %v131 = vmin.f32 %v35, %v97
    %v132 = vmin.f32 %v36, %v99
    %v133 = vmin.f32 %v37, %v101
    %v134 = vmax.f32 %v22, %v71
    %v135 = vmax.f32 %v23, %v73
    %v136 = vmax.f32 %v24, %v75
    %v137 = vmax.f32 %v25, %v77
    %v138 = vmax.f32 %v26, %v79
    %v139 = vmax.f32 %v27, %v81
    %v140 = vmax.f32 %v28, %v83
    %v141 = vmax.f32 %v29, %v85
    %v142 = vmax.f32 %v30, %v87
    %v143 = vmax.f32 %v31, %v89
    %v144 = vmax.f32 %v32, %v91
    %v145 = vmax.f32 %v33, %v93
    %v146 = vmax.f32 %v34, %v95
    %v147 = vmax.f32 %v35, %v97
    %v148 = vmax.f32 %v36, %v99
    %v149 = vmax.f32 %v37, %v101
    %166 = vrot.lane.b32.xlu0 %v38, 2
    %v167 = vpop.permute.xlu0 %166
    %168 = vrot.lane.b32.xlu0 %v39, 2
    %v169 = vpop.permute.xlu0 %168
    %170 = vrot.lane.b32.xlu0 %v40, 2
    %v171 = vpop.permute.xlu0 %170
    %172 = vrot.lane.b32.xlu0 %v41, 2
    %v173 = vpop.permute.xlu0 %172
    %174 = vrot.lane.b32.xlu0 %v42, 2
    %v175 = vpop.permute.xlu0 %174
    %176 = vrot.lane.b32.xlu0 %v43, 2
    %v177 = vpop.permute.xlu0 %176
    %178 = vrot.lane.b32.xlu0 %v44, 2
    %v179 = vpop.permute.xlu0 %178
    %180 = vrot.lane.b32.xlu0 %v45, 2
    %v181 = vpop.permute.xlu0 %180
    %182 = vrot.lane.b32.xlu0 %v46, 2
    %v183 = vpop.permute.xlu0 %182
    %184 = vrot.lane.b32.xlu0 %v47, 2
    %v185 = vpop.permute.xlu0 %184
    %186 = vrot.lane.b32.xlu0 %v48, 2
    %v187 = vpop.permute.xlu0 %186
    %188 = vrot.lane.b32.xlu0 %v49, 2
    %v189 = vpop.permute.xlu0 %188
    %190 = vrot.lane.b32.xlu0 %v50, 2
    %v191 = vpop.permute.xlu0 %190
    %192 = vrot.lane.b32.xlu0 %v51, 2
    %v193 = vpop.permute.xlu0 %192
    %194 = vrot.lane.b32.xlu0 %v52, 2
    %v195 = vpop.permute.xlu0 %194
    %196 = vrot.lane.b32.xlu0 %v53, 2
    %v197 = vpop.permute.xlu0 %196
    %v214 = vmin.f32 %v22, %v167
    %v215 = vmin.f32 %v23, %v169
    %v216 = vmin.f32 %v24, %v171
    %v217 = vmin.f32 %v25, %v173
    %v218 = vmin.f32 %v26, %v175
    %v219 = vmin.f32 %v27, %v177
    %v220 = vmin.f32 %v28, %v179
    %v221 = vmin.f32 %v29, %v181
    %v222 = vmin.f32 %v30, %v183
    %v223 = vmin.f32 %v31, %v185
    %v224 = vmin.f32 %v32, %v187
    %v225 = vmin.f32 %v33, %v189
    %v226 = vmin.f32 %v34, %v191
    %v227 = vmin.f32 %v35, %v193
    %v228 = vmin.f32 %v36, %v195
    %v229 = vmin.f32 %v37, %v197
    %v230 = vmax.f32 %v22, %v167
    %v231 = vmax.f32 %v23, %v169
    %v232 = vmax.f32 %v24, %v171
    %v233 = vmax.f32 %v25, %v173
    %v234 = vmax.f32 %v26, %v175
    %v235 = vmax.f32 %v27, %v177
    %v236 = vmax.f32 %v28, %v179
    %v237 = vmax.f32 %v29, %v181
    %v238 = vmax.f32 %v30, %v183
    %v239 = vmax.f32 %v31, %v185
    %v240 = vmax.f32 %v32, %v187
    %v241 = vmax.f32 %v33, %v189
    %v242 = vmax.f32 %v34, %v191
    %v243 = vmax.f32 %v35, %v193
    %v244 = vmax.f32 %v36, %v195
    %v245 = vmax.f32 %v37, %v197
    %246 = vrot.lane.b32.xlu0 %v38, 127
    %v247 = vpop.permute.xlu0 %246
    %248 = vrot.lane.b32.xlu0 %v39, 127
    %v249 = vpop.permute.xlu0 %248
    %250 = vrot.lane.b32.xlu0 %v40, 127
    %v251 = vpop.permute.xlu0 %250
    %252 = vrot.lane.b32.xlu0 %v41, 127
    %v253 = vpop.permute.xlu0 %252
    %254 = vrot.lane.b32.xlu0 %v42, 127
    %v255 = vpop.permute.xlu0 %254
    %256 = vrot.lane.b32.xlu0 %v43, 127
    %v257 = vpop.permute.xlu0 %256
    %258 = vrot.lane.b32.xlu0 %v44, 127
    %v259 = vpop.permute.xlu0 %258
    %260 = vrot.lane.b32.xlu0 %v45, 127
    %v261 = vpop.permute.xlu0 %260
    %262 = vrot.lane.b32.xlu0 %v46, 127
    %v263 = vpop.permute.xlu0 %262
    %264 = vrot.lane.b32.xlu0 %v47, 127
    %v265 = vpop.permute.xlu0 %264
    %266 = vrot.lane.b32.xlu0 %v48, 127
    %v267 = vpop.permute.xlu0 %266
    %268 = vrot.lane.b32.xlu0 %v49, 127
    %v269 = vpop.permute.xlu0 %268
    %270 = vrot.lane.b32.xlu0 %v50, 127
    %v271 = vpop.permute.xlu0 %270
    %272 = vrot.lane.b32.xlu0 %v51, 127
    %v273 = vpop.permute.xlu0 %272
    %274 = vrot.lane.b32.xlu0 %v52, 127
    %v275 = vpop.permute.xlu0 %274
    %276 = vrot.lane.b32.xlu0 %v53, 127
    %v277 = vpop.permute.xlu0 %276
    %v294 = vmin.f32 %v38, %v247
    %v295 = vmin.f32 %v39, %v249
    %v296 = vmin.f32 %v40, %v251
    %v297 = vmin.f32 %v41, %v253
    %v298 = vmin.f32 %v42, %v255
    %v299 = vmin.f32 %v43, %v257
    %v300 = vmin.f32 %v44, %v259
    %v301 = vmin.f32 %v45, %v261
    %v302 = vmin.f32 %v46, %v263
    %v303 = vmin.f32 %v47, %v265
    %v304 = vmin.f32 %v48, %v267
    %v305 = vmin.f32 %v49, %v269
    %v306 = vmin.f32 %v50, %v271
    %v307 = vmin.f32 %v51, %v273
    %v308 = vmin.f32 %v52, %v275
    %v309 = vmin.f32 %v53, %v277
    %v310 = vmax.f32 %v38, %v247
    %v311 = vmax.f32 %v39, %v249
    %v312 = vmax.f32 %v40, %v251
    %v313 = vmax.f32 %v41, %v253
    %v314 = vmax.f32 %v42, %v255
    %v315 = vmax.f32 %v43, %v257
    %v316 = vmax.f32 %v44, %v259
    %v317 = vmax.f32 %v45, %v261
    %v318 = vmax.f32 %v46, %v263
    %v319 = vmax.f32 %v47, %v265
    %v320 = vmax.f32 %v48, %v267
    %v321 = vmax.f32 %v49, %v269
    %v322 = vmax.f32 %v50, %v271
    %v323 = vmax.f32 %v51, %v273
    %v324 = vmax.f32 %v52, %v275
    %v325 = vmax.f32 %v53, %v277
    %342 = vrot.lane.b32.xlu0 %v214, 126
    %v343 = vpop.permute.xlu0 %342
    %344 = vrot.lane.b32.xlu0 %v215, 126
    %v345 = vpop.permute.xlu0 %344
    %346 = vrot.lane.b32.xlu0 %v216, 126
    %v347 = vpop.permute.xlu0 %346
    %348 = vrot.lane.b32.xlu0 %v217, 126
    %v349 = vpop.permute.xlu0 %348
    %350 = vrot.lane.b32.xlu0 %v218, 126
    %v351 = vpop.permute.xlu0 %350
    %352 = vrot.lane.b32.xlu0 %v219, 126
    %v353 = vpop.permute.xlu0 %352
    %354 = vrot.lane.b32.xlu0 %v220, 126
    %v355 = vpop.permute.xlu0 %354
    %356 = vrot.lane.b32.xlu0 %v221, 126
    %v357 = vpop.permute.xlu0 %356
    %358 = vrot.lane.b32.xlu0 %v222, 126
    %v359 = vpop.permute.xlu0 %358
    %360 = vrot.lane.b32.xlu0 %v223, 126
    %v361 = vpop.permute.xlu0 %360
    %362 = vrot.lane.b32.xlu0 %v224, 126
    %v363 = vpop.permute.xlu0 %362
    %364 = vrot.lane.b32.xlu0 %v225, 126
    %v365 = vpop.permute.xlu0 %364
    %366 = vrot.lane.b32.xlu0 %v226, 126
    %v367 = vpop.permute.xlu0 %366
    %368 = vrot.lane.b32.xlu0 %v227, 126
    %v369 = vpop.permute.xlu0 %368
    %370 = vrot.lane.b32.xlu0 %v228, 126
    %v371 = vpop.permute.xlu0 %370
    %372 = vrot.lane.b32.xlu0 %v229, 126
    %v373 = vpop.permute.xlu0 %372
    %v390 = vmin.f32 %v118, %v343
    %v391 = vmin.f32 %v119, %v345
    %v392 = vmin.f32 %v120, %v347
    %v393 = vmin.f32 %v121, %v349
    %v394 = vmin.f32 %v122, %v351
    %v395 = vmin.f32 %v123, %v353
    %v396 = vmin.f32 %v124, %v355
    %v397 = vmin.f32 %v125, %v357
    %v398 = vmin.f32 %v126, %v359
    %v399 = vmin.f32 %v127, %v361
    %v400 = vmin.f32 %v128, %v363
    %v401 = vmin.f32 %v129, %v365
    %v402 = vmin.f32 %v130, %v367
    %v403 = vmin.f32 %v131, %v369
    %v404 = vmin.f32 %v132, %v371
    %v405 = vmin.f32 %v133, %v373
    %v406 = vmax.f32 %v118, %v343
    %v407 = vmax.f32 %v119, %v345
    %v408 = vmax.f32 %v120, %v347
    %v409 = vmax.f32 %v121, %v349
    %v410 = vmax.f32 %v122, %v351
    %v411 = vmax.f32 %v123, %v353
    %v412 = vmax.f32 %v124, %v355
    %v413 = vmax.f32 %v125, %v357
    %v414 = vmax.f32 %v126, %v359
    %v415 = vmax.f32 %v127, %v361
    %v416 = vmax.f32 %v128, %v363
    %v417 = vmax.f32 %v129, %v365
    %v418 = vmax.f32 %v130, %v367
    %v419 = vmax.f32 %v131, %v369
    %v420 = vmax.f32 %v132, %v371
    %v421 = vmax.f32 %v133, %v373
    %438 = vrot.lane.b32.xlu0 %v294, 127
    %v439 = vpop.permute.xlu0 %438
    %440 = vrot.lane.b32.xlu0 %v295, 127
    %v441 = vpop.permute.xlu0 %440
    %442 = vrot.lane.b32.xlu0 %v296, 127
    %v443 = vpop.permute.xlu0 %442
    %444 = vrot.lane.b32.xlu0 %v297, 127
    %v445 = vpop.permute.xlu0 %444
    %446 = vrot.lane.b32.xlu0 %v298, 127
    %v447 = vpop.permute.xlu0 %446
    %448 = vrot.lane.b32.xlu0 %v299, 127
    %v449 = vpop.permute.xlu0 %448
    %450 = vrot.lane.b32.xlu0 %v300, 127
    %v451 = vpop.permute.xlu0 %450
    %452 = vrot.lane.b32.xlu0 %v301, 127
    %v453 = vpop.permute.xlu0 %452
    %454 = vrot.lane.b32.xlu0 %v302, 127
    %v455 = vpop.permute.xlu0 %454
    %456 = vrot.lane.b32.xlu0 %v303, 127
    %v457 = vpop.permute.xlu0 %456
    %458 = vrot.lane.b32.xlu0 %v304, 127
    %v459 = vpop.permute.xlu0 %458
    %460 = vrot.lane.b32.xlu0 %v305, 127
    %v461 = vpop.permute.xlu0 %460
    %462 = vrot.lane.b32.xlu0 %v306, 127
    %v463 = vpop.permute.xlu0 %462
    %464 = vrot.lane.b32.xlu0 %v307, 127
    %v465 = vpop.permute.xlu0 %464
    %466 = vrot.lane.b32.xlu0 %v308, 127
    %v467 = vpop.permute.xlu0 %466
    %468 = vrot.lane.b32.xlu0 %v309, 127
    %v469 = vpop.permute.xlu0 %468
    %v486 = vmax.f32 %v390, %v439
    %v487 = vmax.f32 %v391, %v441
    %v488 = vmax.f32 %v392, %v443
    %v489 = vmax.f32 %v393, %v445
    %v490 = vmax.f32 %v394, %v447
    %v491 = vmax.f32 %v395, %v449
    %v492 = vmax.f32 %v396, %v451
    %v493 = vmax.f32 %v397, %v453
    %v494 = vmax.f32 %v398, %v455
    %v495 = vmax.f32 %v399, %v457
    %v496 = vmax.f32 %v400, %v459
    %v497 = vmax.f32 %v401, %v461
    %v498 = vmax.f32 %v402, %v463
    %v499 = vmax.f32 %v403, %v465
    %v500 = vmax.f32 %v404, %v467
    %v501 = vmax.f32 %v405, %v469
    %518 = vrot.lane.b32.xlu0 %v230, 126
    %v519 = vpop.permute.xlu0 %518
    %520 = vrot.lane.b32.xlu0 %v231, 126
    %v521 = vpop.permute.xlu0 %520
    %522 = vrot.lane.b32.xlu0 %v232, 126
    %v523 = vpop.permute.xlu0 %522
    %524 = vrot.lane.b32.xlu0 %v233, 126
    %v525 = vpop.permute.xlu0 %524
    %526 = vrot.lane.b32.xlu0 %v234, 126
    %v527 = vpop.permute.xlu0 %526
    %528 = vrot.lane.b32.xlu0 %v235, 126
    %v529 = vpop.permute.xlu0 %528
    %530 = vrot.lane.b32.xlu0 %v236, 126
    %v531 = vpop.permute.xlu0 %530
    %532 = vrot.lane.b32.xlu0 %v237, 126
    %v533 = vpop.permute.xlu0 %532
    %534 = vrot.lane.b32.xlu0 %v238, 126
    %v535 = vpop.permute.xlu0 %534
    %536 = vrot.lane.b32.xlu0 %v239, 126
    %v537 = vpop.permute.xlu0 %536
    %538 = vrot.lane.b32.xlu0 %v240, 126
    %v539 = vpop.permute.xlu0 %538
    %540 = vrot.lane.b32.xlu0 %v241, 126
    %v541 = vpop.permute.xlu0 %540
    %542 = vrot.lane.b32.xlu0 %v242, 126
    %v543 = vpop.permute.xlu0 %542
    %544 = vrot.lane.b32.xlu0 %v243, 126
    %v545 = vpop.permute.xlu0 %544
    %546 = vrot.lane.b32.xlu0 %v244, 126
    %v547 = vpop.permute.xlu0 %546
    %548 = vrot.lane.b32.xlu0 %v245, 126
    %v549 = vpop.permute.xlu0 %548
    %v566 = vmin.f32 %v134, %v519
    %v567 = vmin.f32 %v135, %v521
    %v568 = vmin.f32 %v136, %v523
    %v569 = vmin.f32 %v137, %v525
    %v570 = vmin.f32 %v138, %v527
    %v571 = vmin.f32 %v139, %v529
    %v572 = vmin.f32 %v140, %v531
    %v573 = vmin.f32 %v141, %v533
    %v574 = vmin.f32 %v142, %v535
    %v575 = vmin.f32 %v143, %v537
    %v576 = vmin.f32 %v144, %v539
    %v577 = vmin.f32 %v145, %v541
    %v578 = vmin.f32 %v146, %v543
    %v579 = vmin.f32 %v147, %v545
    %v580 = vmin.f32 %v148, %v547
    %v581 = vmin.f32 %v149, %v549
    %v582 = vmax.f32 %v134, %v519
    %v583 = vmax.f32 %v135, %v521
    %v584 = vmax.f32 %v136, %v523
    %v585 = vmax.f32 %v137, %v525
    %v586 = vmax.f32 %v138, %v527
    %v587 = vmax.f32 %v139, %v529
    %v588 = vmax.f32 %v140, %v531
    %v589 = vmax.f32 %v141, %v533
    %v590 = vmax.f32 %v142, %v535
    %v591 = vmax.f32 %v143, %v537
    %v592 = vmax.f32 %v144, %v539
    %v593 = vmax.f32 %v145, %v541
    %v594 = vmax.f32 %v146, %v543
    %v595 = vmax.f32 %v147, %v545
    %v596 = vmax.f32 %v148, %v547
    %v597 = vmax.f32 %v149, %v549
    %614 = vrot.lane.b32.xlu0 %v310, 127
    %v615 = vpop.permute.xlu0 %614
    %616 = vrot.lane.b32.xlu0 %v311, 127
    %v617 = vpop.permute.xlu0 %616
    %618 = vrot.lane.b32.xlu0 %v312, 127
    %v619 = vpop.permute.xlu0 %618
    %620 = vrot.lane.b32.xlu0 %v313, 127
    %v621 = vpop.permute.xlu0 %620
    %622 = vrot.lane.b32.xlu0 %v314, 127
    %v623 = vpop.permute.xlu0 %622
    %624 = vrot.lane.b32.xlu0 %v315, 127
    %v625 = vpop.permute.xlu0 %624
    %626 = vrot.lane.b32.xlu0 %v316, 127
    %v627 = vpop.permute.xlu0 %626
    %628 = vrot.lane.b32.xlu0 %v317, 127
    %v629 = vpop.permute.xlu0 %628
    %630 = vrot.lane.b32.xlu0 %v318, 127
    %v631 = vpop.permute.xlu0 %630
    %632 = vrot.lane.b32.xlu0 %v319, 127
    %v633 = vpop.permute.xlu0 %632
    %634 = vrot.lane.b32.xlu0 %v320, 127
    %v635 = vpop.permute.xlu0 %634
    %636 = vrot.lane.b32.xlu0 %v321, 127
    %v637 = vpop.permute.xlu0 %636
    %638 = vrot.lane.b32.xlu0 %v322, 127
    %v639 = vpop.permute.xlu0 %638
    %640 = vrot.lane.b32.xlu0 %v323, 127
    %v641 = vpop.permute.xlu0 %640
    %642 = vrot.lane.b32.xlu0 %v324, 127
    %v643 = vpop.permute.xlu0 %642
    %644 = vrot.lane.b32.xlu0 %v325, 127
    %v645 = vpop.permute.xlu0 %644
    %v662 = vmin.f32 %v582, %v615
    %v663 = vmin.f32 %v583, %v617
    %v664 = vmin.f32 %v584, %v619
    %v665 = vmin.f32 %v585, %v621
    %v666 = vmin.f32 %v586, %v623
    %v667 = vmin.f32 %v587, %v625
    %v668 = vmin.f32 %v588, %v627
    %v669 = vmin.f32 %v589, %v629
    %v670 = vmin.f32 %v590, %v631
    %v671 = vmin.f32 %v591, %v633
    %v672 = vmin.f32 %v592, %v635
    %v673 = vmin.f32 %v593, %v637
    %v674 = vmin.f32 %v594, %v639
    %v675 = vmin.f32 %v595, %v641
    %v676 = vmin.f32 %v596, %v643
    %v677 = vmin.f32 %v597, %v645
    %v678 = vld [vmem:[#allocation2 + $0x2] sm:$0xff]
    %v679 = vld [vmem:[#allocation2 + $0xa] sm:$0x3f]
    %v680 = vld [vmem:[#allocation2 + $0x12] sm:$0xff]
    %v681 = vld [vmem:[#allocation2 + $0x1a] sm:$0x3f]
    %v682 = vld [vmem:[#allocation2 + $0x22] sm:$0xff]
    %v683 = vld [vmem:[#allocation2 + $0x2a] sm:$0x3f]
    %v684 = vld [vmem:[#allocation2 + $0x32] sm:$0xff]
    %v685 = vld [vmem:[#allocation2 + $0x3a] sm:$0x3f]
    %v686 = vld [vmem:[#allocation2 + $0x42] sm:$0xff]
    %v687 = vld [vmem:[#allocation2 + $0x4a] sm:$0x3f]
    %v688 = vld [vmem:[#allocation2 + $0x52] sm:$0xff]
    %v689 = vld [vmem:[#allocation2 + $0x5a] sm:$0x3f]
    %v690 = vld [vmem:[#allocation2 + $0x62] sm:$0xff]
    %v691 = vld [vmem:[#allocation2 + $0x6a] sm:$0x3f]
    %v692 = vld [vmem:[#allocation2 + $0x72] sm:$0xff]
    %v693 = vld [vmem:[#allocation2 + $0x7a] sm:$0x3f]
    %v694 = vmin.f32 %v566, %v406
    %v695 = vmin.f32 %v567, %v407
    %v696 = vmin.f32 %v568, %v408
    %v697 = vmin.f32 %v569, %v409
    %v698 = vmin.f32 %v570, %v410
    %v699 = vmin.f32 %v571, %v411
    %v700 = vmin.f32 %v572, %v412
    %v701 = vmin.f32 %v573, %v413
    %v702 = vmin.f32 %v574, %v414
    %v703 = vmin.f32 %v575, %v415
    %v704 = vmin.f32 %v576, %v416
    %v705 = vmin.f32 %v577, %v417
    %v706 = vmin.f32 %v578, %v418
    %v707 = vmin.f32 %v579, %v419
    %v708 = vmin.f32 %v580, %v420
    %v709 = vmin.f32 %v581, %v421
    %v710 = vmax.f32 %v566, %v406
    %v711 = vmax.f32 %v567, %v407
    %v712 = vmax.f32 %v568, %v408
    %v713 = vmax.f32 %v569, %v409
    %v714 = vmax.f32 %v570, %v410
    %v715 = vmax.f32 %v571, %v411
    %v716 = vmax.f32 %v572, %v412
    %v717 = vmax.f32 %v573, %v413
    %v718 = vmax.f32 %v574, %v414
    %v719 = vmax.f32 %v575, %v415
    %v720 = vmax.f32 %v576, %v416
    %v721 = vmax.f32 %v577, %v417
    %v722 = vmax.f32 %v578, %v418
    %v723 = vmax.f32 %v579, %v419
    %v724 = vmax.f32 %v580, %v420
    %v725 = vmax.f32 %v581, %v421
    %v726 = vmin.f32 %v662, %v486
    %v727 = vmin.f32 %v663, %v487
    %v728 = vmin.f32 %v664, %v488
    %v729 = vmin.f32 %v665, %v489
    %v730 = vmin.f32 %v666, %v490
    %v731 = vmin.f32 %v667, %v491
    %v732 = vmin.f32 %v668, %v492
    %v733 = vmin.f32 %v669, %v493
    %v734 = vmin.f32 %v670, %v494
    %v735 = vmin.f32 %v671, %v495
    %v736 = vmin.f32 %v672, %v496
    %v737 = vmin.f32 %v673, %v497
    %v738 = vmin.f32 %v674, %v498
    %v739 = vmin.f32 %v675, %v499
    %v740 = vmin.f32 %v676, %v500
    %v741 = vmin.f32 %v677, %v501
    %v742 = vmax.f32 %v662, %v486
    %v743 = vmax.f32 %v663, %v487
    %v744 = vmax.f32 %v664, %v488
    %v745 = vmax.f32 %v665, %v489
    %v746 = vmax.f32 %v666, %v490
    %v747 = vmax.f32 %v667, %v491
    %v748 = vmax.f32 %v668, %v492
    %v749 = vmax.f32 %v669, %v493
    %v750 = vmax.f32 %v670, %v494
    %v751 = vmax.f32 %v671, %v495
    %v752 = vmax.f32 %v672, %v496
    %v753 = vmax.f32 %v673, %v497
    %v754 = vmax.f32 %v674, %v498
    %v755 = vmax.f32 %v675, %v499
    %v756 = vmax.f32 %v676, %v500
    %v757 = vmax.f32 %v677, %v501
    %v758 = vmin.f32 %v694, %v726
    %v759 = vmin.f32 %v695, %v727
    %v760 = vmin.f32 %v696, %v728
    %v761 = vmin.f32 %v697, %v729
    %v762 = vmin.f32 %v698, %v730
    %v763 = vmin.f32 %v699, %v731
    %v764 = vmin.f32 %v700, %v732
    %v765 = vmin.f32 %v701, %v733
    %v766 = vmin.f32 %v702, %v734
    %v767 = vmin.f32 %v703, %v735
    %v768 = vmin.f32 %v704, %v736
    %v769 = vmin.f32 %v705, %v737
    %v770 = vmin.f32 %v706, %v738
    %v771 = vmin.f32 %v707, %v739
    %v772 = vmin.f32 %v708, %v740
    %v773 = vmin.f32 %v709, %v741
    %v774 = vmax.f32 %v694, %v726
    %v775 = vmax.f32 %v695, %v727
    %v776 = vmax.f32 %v696, %v728
    %v777 = vmax.f32 %v697, %v729
    %v778 = vmax.f32 %v698, %v730
    %v779 = vmax.f32 %v699, %v731
    %v780 = vmax.f32 %v700, %v732
    %v781 = vmax.f32 %v701, %v733
    %v782 = vmax.f32 %v702, %v734
    %v783 = vmax.f32 %v703, %v735
    %v784 = vmax.f32 %v704, %v736
    %v785 = vmax.f32 %v705, %v737
    %v786 = vmax.f32 %v706, %v738
    %v787 = vmax.f32 %v707, %v739
    %v788 = vmax.f32 %v708, %v740
    %v789 = vmax.f32 %v709, %v741
    %v790 = vmax.f32 %v758, %v678
    %v791 = vmax.f32 %v759, %v679
    %v792 = vmax.f32 %v760, %v680
    %v793 = vmax.f32 %v761, %v681
    %v794 = vmax.f32 %v762, %v682
    %v795 = vmax.f32 %v763, %v683
    %v796 = vmax.f32 %v764, %v684
    %v797 = vmax.f32 %v765, %v685
    %v798 = vmax.f32 %v766, %v686
    %v799 = vmax.f32 %v767, %v687
    %v800 = vmax.f32 %v768, %v688
    %v801 = vmax.f32 %v769, %v689
    %v802 = vmax.f32 %v770, %v690
    %v803 = vmax.f32 %v771, %v691
    %v804 = vmax.f32 %v772, %v692
    %v805 = vmax.f32 %v773, %v693
    %v806 = vmin.f32 %v710, %v742
    %v807 = vmin.f32 %v711, %v743
    %v808 = vmin.f32 %v712, %v744
    %v809 = vmin.f32 %v713, %v745
    %v810 = vmin.f32 %v714, %v746
    %v811 = vmin.f32 %v715, %v747
    %v812 = vmin.f32 %v716, %v748
    %v813 = vmin.f32 %v717, %v749
    %v814 = vmin.f32 %v718, %v750
    %v815 = vmin.f32 %v719, %v751
    %v816 = vmin.f32 %v720, %v752
    %v817 = vmin.f32 %v721, %v753
    %v818 = vmin.f32 %v722, %v754
    %v819 = vmin.f32 %v723, %v755
    %v820 = vmin.f32 %v724, %v756
    %v821 = vmin.f32 %v725, %v757
    %v822 = vmax.f32 %v710, %v742
    %v823 = vmax.f32 %v711, %v743
    %v824 = vmax.f32 %v712, %v744
    %v825 = vmax.f32 %v713, %v745
    %v826 = vmax.f32 %v714, %v746
    %v827 = vmax.f32 %v715, %v747
    %v828 = vmax.f32 %v716, %v748
    %v829 = vmax.f32 %v717, %v749
    %v830 = vmax.f32 %v718, %v750
    %v831 = vmax.f32 %v719, %v751
    %v832 = vmax.f32 %v720, %v752
    %v833 = vmax.f32 %v721, %v753
    %v834 = vmax.f32 %v722, %v754
    %v835 = vmax.f32 %v723, %v755
    %v836 = vmax.f32 %v724, %v756
    %v837 = vmax.f32 %v725, %v757
    %v838 = vmin.f32 %v822, %v790
    %v839 = vmin.f32 %v823, %v791
    %v840 = vmin.f32 %v824, %v792
    %v841 = vmin.f32 %v825, %v793
    %v842 = vmin.f32 %v826, %v794
    %v843 = vmin.f32 %v827, %v795
    %v844 = vmin.f32 %v828, %v796
    %v845 = vmin.f32 %v829, %v797
    %v846 = vmin.f32 %v830, %v798
    %v847 = vmin.f32 %v831, %v799
    %v848 = vmin.f32 %v832, %v800
    %v849 = vmin.f32 %v833, %v801
    %v850 = vmin.f32 %v834, %v802
    %v851 = vmin.f32 %v835, %v803
    %v852 = vmin.f32 %v836, %v804
    %v853 = vmin.f32 %v837, %v805
    %v854 = vmin.f32 %v806, %v774
    %v855 = vmin.f32 %v807, %v775
    %v856 = vmin.f32 %v808, %v776
    %v857 = vmin.f32 %v809, %v777
    %v858 = vmin.f32 %v810, %v778
    %v859 = vmin.f32 %v811, %v779
    %v860 = vmin.f32 %v812, %v780
    %v861 = vmin.f32 %v813, %v781
    %v862 = vmin.f32 %v814, %v782
    %v863 = vmin.f32 %v815, %v783
    %v864 = vmin.f32 %v816, %v784
    %v865 = vmin.f32 %v817, %v785
    %v866 = vmin.f32 %v818, %v786
    %v867 = vmin.f32 %v819, %v787
    %v868 = vmin.f32 %v820, %v788
    %v869 = vmin.f32 %v821, %v789
    %v870 = vmax.f32 %v806, %v774
    %v871 = vmax.f32 %v807, %v775
    %v872 = vmax.f32 %v808, %v776
    %v873 = vmax.f32 %v809, %v777
    %v874 = vmax.f32 %v810, %v778
    %v875 = vmax.f32 %v811, %v779
    %v876 = vmax.f32 %v812, %v780
    %v877 = vmax.f32 %v813, %v781
    %v878 = vmax.f32 %v814, %v782
    %v879 = vmax.f32 %v815, %v783
    %v880 = vmax.f32 %v816, %v784
    %v881 = vmax.f32 %v817, %v785
    %v882 = vmax.f32 %v818, %v786
    %v883 = vmax.f32 %v819, %v787
    %v884 = vmax.f32 %v820, %v788
    %v885 = vmax.f32 %v821, %v789
    %902 = vrot.lane.b32.xlu0 %v678, 127
    %v903 = vpop.permute.xlu0 %902
    %904 = vrot.lane.b32.xlu0 %v679, 127
    %v905 = vpop.permute.xlu0 %904
    %906 = vrot.lane.b32.xlu0 %v680, 127
    %v907 = vpop.permute.xlu0 %906
    %908 = vrot.lane.b32.xlu0 %v681, 127
    %v909 = vpop.permute.xlu0 %908
    %910 = vrot.lane.b32.xlu0 %v682, 127
    %v911 = vpop.permute.xlu0 %910
    %912 = vrot.lane.b32.xlu0 %v683, 127
    %v913 = vpop.permute.xlu0 %912
    %914 = vrot.lane.b32.xlu0 %v684, 127
    %v915 = vpop.permute.xlu0 %914
    %916 = vrot.lane.b32.xlu0 %v685, 127
    %v917 = vpop.permute.xlu0 %916
    %918 = vrot.lane.b32.xlu0 %v686, 127
    %v919 = vpop.permute.xlu0 %918
    %920 = vrot.lane.b32.xlu0 %v687, 127
    %v921 = vpop.permute.xlu0 %920
    %922 = vrot.lane.b32.xlu0 %v688, 127
    %v923 = vpop.permute.xlu0 %922
    %924 = vrot.lane.b32.xlu0 %v689, 127
    %v925 = vpop.permute.xlu0 %924
    %926 = vrot.lane.b32.xlu0 %v690, 127
    %v927 = vpop.permute.xlu0 %926
    %928 = vrot.lane.b32.xlu0 %v691, 127
    %v929 = vpop.permute.xlu0 %928
    %930 = vrot.lane.b32.xlu0 %v692, 127
    %v931 = vpop.permute.xlu0 %930
    %932 = vrot.lane.b32.xlu0 %v693, 127
    %v933 = vpop.permute.xlu0 %932
    %v950 = vmin.f32 %v838, %v903
    %v951 = vmin.f32 %v839, %v905
    %v952 = vmin.f32 %v840, %v907
    %v953 = vmin.f32 %v841, %v909
    %v954 = vmin.f32 %v842, %v911
    %v955 = vmin.f32 %v843, %v913
    %v956 = vmin.f32 %v844, %v915
    %v957 = vmin.f32 %v845, %v917
    %v958 = vmin.f32 %v846, %v919
    %v959 = vmin.f32 %v847, %v921
    %v960 = vmin.f32 %v848, %v923
    %v961 = vmin.f32 %v849, %v925
    %v962 = vmin.f32 %v850, %v927
    %v963 = vmin.f32 %v851, %v929
    %v964 = vmin.f32 %v852, %v931
    %v965 = vmin.f32 %v853, %v933
    %v966 = vmax.f32 %v838, %v903
    %v967 = vmax.f32 %v839, %v905
    %v968 = vmax.f32 %v840, %v907
    %v969 = vmax.f32 %v841, %v909
    %v970 = vmax.f32 %v842, %v911
    %v971 = vmax.f32 %v843, %v913
    %v972 = vmax.f32 %v844, %v915
    %v973 = vmax.f32 %v845, %v917
    %v974 = vmax.f32 %v846, %v919
    %v975 = vmax.f32 %v847, %v921
    %v976 = vmax.f32 %v848, %v923
    %v977 = vmax.f32 %v849, %v925
    %v978 = vmax.f32 %v850, %v927
    %v979 = vmax.f32 %v851, %v929
    %v980 = vmax.f32 %v852, %v931
    %v981 = vmax.f32 %v853, %v933
    %v982 = vmax.f32 %v854, %v950
    %v983 = vmax.f32 %v855, %v951
    %v984 = vmax.f32 %v856, %v952
    %v985 = vmax.f32 %v857, %v953
    %v986 = vmax.f32 %v858, %v954
    %v987 = vmax.f32 %v859, %v955
    %v988 = vmax.f32 %v860, %v956
    %v989 = vmax.f32 %v861, %v957
    %v990 = vmax.f32 %v862, %v958
    %v991 = vmax.f32 %v863, %v959
    %v992 = vmax.f32 %v864, %v960
    %v993 = vmax.f32 %v865, %v961
    %v994 = vmax.f32 %v866, %v962
    %v995 = vmax.f32 %v867, %v963
    %v996 = vmax.f32 %v868, %v964
    %v997 = vmax.f32 %v869, %v965
    %v998 = vmin.f32 %v870, %v966
    %v999 = vmin.f32 %v871, %v967
    %v1000 = vmin.f32 %v872, %v968
    %v1001 = vmin.f32 %v873, %v969
    %v1002 = vmin.f32 %v874, %v970
    %v1003 = vmin.f32 %v875, %v971
    %v1004 = vmin.f32 %v876, %v972
    %v1005 = vmin.f32 %v877, %v973
    %v1006 = vmin.f32 %v878, %v974
    %v1007 = vmin.f32 %v879, %v975
    %v1008 = vmin.f32 %v880, %v976
    %v1009 = vmin.f32 %v881, %v977
    %v1010 = vmin.f32 %v882, %v978
    %v1011 = vmin.f32 %v883, %v979
    %v1012 = vmin.f32 %v884, %v980
    %v1013 = vmin.f32 %v885, %v981
    %v1014 = vmin.f32 %v998, %v982
    %v1015 = vmin.f32 %v999, %v983
    %v1016 = vmin.f32 %v1000, %v984
    %v1017 = vmin.f32 %v1001, %v985
    %v1018 = vmin.f32 %v1002, %v986
    %v1019 = vmin.f32 %v1003, %v987
    %v1020 = vmin.f32 %v1004, %v988
    %v1021 = vmin.f32 %v1005, %v989
    %v1022 = vmin.f32 %v1006, %v990
    %v1023 = vmin.f32 %v1007, %v991
    %v1024 = vmin.f32 %v1008, %v992
    %v1025 = vmin.f32 %v1009, %v993
    %v1026 = vmin.f32 %v1010, %v994
    %v1027 = vmin.f32 %v1011, %v995
    %v1028 = vmin.f32 %v1012, %v996
    %v1029 = vmin.f32 %v1013, %v997
    %v1030 = vmax.f32 %v998, %v982
    %v1031 = vmax.f32 %v999, %v983
    %v1032 = vmax.f32 %v1000, %v984
    %v1033 = vmax.f32 %v1001, %v985
    %v1034 = vmax.f32 %v1002, %v986
    %v1035 = vmax.f32 %v1003, %v987
    %v1036 = vmax.f32 %v1004, %v988
    %v1037 = vmax.f32 %v1005, %v989
    %v1038 = vmax.f32 %v1006, %v990
    %v1039 = vmax.f32 %v1007, %v991
    %v1040 = vmax.f32 %v1008, %v992
    %v1041 = vmax.f32 %v1009, %v993
    %v1042 = vmax.f32 %v1010, %v994
    %v1043 = vmax.f32 %v1011, %v995
    %v1044 = vmax.f32 %v1012, %v996
    %v1045 = vmax.f32 %v1013, %v997
    %1046 = vrot.lane.b32.xlu0 %v678, 126
    %v1047 = vpop.permute.xlu0 %1046
    %1048 = vrot.lane.b32.xlu0 %v679, 126
    %v1049 = vpop.permute.xlu0 %1048
    %1050 = vrot.lane.b32.xlu0 %v680, 126
    %v1051 = vpop.permute.xlu0 %1050
    %1052 = vrot.lane.b32.xlu0 %v681, 126
    %v1053 = vpop.permute.xlu0 %1052
    %1054 = vrot.lane.b32.xlu0 %v682, 126
    %v1055 = vpop.permute.xlu0 %1054
    %1056 = vrot.lane.b32.xlu0 %v683, 126
    %v1057 = vpop.permute.xlu0 %1056
    %1058 = vrot.lane.b32.xlu0 %v684, 126
    %v1059 = vpop.permute.xlu0 %1058
    %1060 = vrot.lane.b32.xlu0 %v685, 126
    %v1061 = vpop.permute.xlu0 %1060
    %1062 = vrot.lane.b32.xlu0 %v686, 126
    %v1063 = vpop.permute.xlu0 %1062
    %1064 = vrot.lane.b32.xlu0 %v687, 126
    %v1065 = vpop.permute.xlu0 %1064
    %1066 = vrot.lane.b32.xlu0 %v688, 126
    %v1067 = vpop.permute.xlu0 %1066
    %1068 = vrot.lane.b32.xlu0 %v689, 126
    %v1069 = vpop.permute.xlu0 %1068
    %1070 = vrot.lane.b32.xlu0 %v690, 126
    %v1071 = vpop.permute.xlu0 %1070
    %1072 = vrot.lane.b32.xlu0 %v691, 126
    %v1073 = vpop.permute.xlu0 %1072
    %1074 = vrot.lane.b32.xlu0 %v692, 126
    %v1075 = vpop.permute.xlu0 %1074
    %1076 = vrot.lane.b32.xlu0 %v693, 126
    %v1077 = vpop.permute.xlu0 %1076
    %v1094 = vmax.f32 %v1014, %v1047
    %v1095 = vmax.f32 %v1015, %v1049
    %v1096 = vmax.f32 %v1016, %v1051
    %v1097 = vmax.f32 %v1017, %v1053
    %v1098 = vmax.f32 %v1018, %v1055
    %v1099 = vmax.f32 %v1019, %v1057
    %v1100 = vmax.f32 %v1020, %v1059
    %v1101 = vmax.f32 %v1021, %v1061
    %v1102 = vmax.f32 %v1022, %v1063
    %v1103 = vmax.f32 %v1023, %v1065
    %v1104 = vmax.f32 %v1024, %v1067
    %v1105 = vmax.f32 %v1025, %v1069
    %v1106 = vmax.f32 %v1026, %v1071
    %v1107 = vmax.f32 %v1027, %v1073
    %v1108 = vmax.f32 %v1028, %v1075
    %v1109 = vmax.f32 %v1029, %v1077
    %v1110 = vmin.f32 %v1030, %v1094
    %v1111 = vmin.f32 %v1031, %v1095
    %v1112 = vmin.f32 %v1032, %v1096
    %v1113 = vmin.f32 %v1033, %v1097
    %v1114 = vmin.f32 %v1034, %v1098
    %v1115 = vmin.f32 %v1035, %v1099
    %v1116 = vmin.f32 %v1036, %v1100
    %v1117 = vmin.f32 %v1037, %v1101
    %v1118 = vmin.f32 %v1038, %v1102
    %v1119 = vmin.f32 %v1039, %v1103
    %v1120 = vmin.f32 %v1040, %v1104
    %v1121 = vmin.f32 %v1041, %v1105
    %v1122 = vmin.f32 %v1042, %v1106
    %v1123 = vmin.f32 %v1043, %v1107
    %v1124 = vmin.f32 %v1044, %v1108
    %v1125 = vmin.f32 %v1045, %v1109
    %vm1126 = vcmask 113664
    %1127 = vst.msk [vmem:[%s1] sm:$0xff] %vm1126, %v1110
    %vm1128 = vcmask 111616
    %1129 = vst.msk [vmem:[%s1 + $0x8] sm:$0x3f] %vm1128, %v1111
    %1130 = vst.msk [vmem:[%s1 + $0x10] sm:$0xff] %vm1126, %v1112
    %1131 = vst.msk [vmem:[%s1 + $0x18] sm:$0x3f] %vm1128, %v1113
    %1132 = vst.msk [vmem:[%s1 + $0x20] sm:$0xff] %vm1126, %v1114
    %1133 = vst.msk [vmem:[%s1 + $0x28] sm:$0x3f] %vm1128, %v1115
    %1134 = vst.msk [vmem:[%s1 + $0x30] sm:$0xff] %vm1126, %v1116
    %1135 = vst.msk [vmem:[%s1 + $0x38] sm:$0x3f] %vm1128, %v1117
    %1136 = vst.msk [vmem:[%s1 + $0x40] sm:$0xff] %vm1126, %v1118
    %1137 = vst.msk [vmem:[%s1 + $0x48] sm:$0x3f] %vm1128, %v1119
    %1138 = vst.msk [vmem:[%s1 + $0x50] sm:$0xff] %vm1126, %v1120
    %1139 = vst.msk [vmem:[%s1 + $0x58] sm:$0x3f] %vm1128, %v1121
    %1140 = vst.msk [vmem:[%s1 + $0x60] sm:$0xff] %vm1126, %v1122
    %1141 = vst.msk [vmem:[%s1 + $0x68] sm:$0x3f] %vm1128, %v1123
    %1142 = vst.msk [vmem:[%s1 + $0x70] sm:$0xff] %vm1126, %v1124
    %1143 = vst.msk [vmem:[%s1 + $0x78] sm:$0x3f] %vm1128, %v1125
    // Predicated region
    $region10: #{tpu_custom_call.1} parent=1 // pred_check
      _
    $region11: #{tpu_custom_call.1} parent=1 // pred_check_branch
      %1145 = sbr.rel (0) target = $region13
    $region12: #{tpu_custom_call.1} parent=1 // pred_region
      _
    $region13: #{tpu_custom_call.1} parent=1 // pred_fallthru
      _
    // Predicated region
    $region14: #{tpu_custom_call.1} parent=1 // pred_check
      _
    $region15: #{tpu_custom_call.1} parent=1 // pred_check_branch
      %1147 = sbr.rel (0) target = $region17
    $region16: #{tpu_custom_call.1} parent=1 // pred_region
      _
    $region17: #{tpu_custom_call.1} parent=1 // pred_fallthru
      _
    %1148 = vsyncpa [#allocation3], 1

</llo_original>
